<compile_context>
chip_gen: v7x
topology: tpu7x:2x2x1
jax: 0.10.0
libtpu: 0.0.40
codegen_flags: <defaults>
</compile_context>

<pallas_src>
import functools

import numpy as np
import jax
import jax.numpy as jnp
from jax.experimental import pallas as pl
from jax.experimental.pallas import tpu as pltpu


_VMEM_LIMIT_BYTES = 32 * 1024 * 1024   # safe scoped-VMEM limit on v5e/v6e/v7x
_TILE_BUDGET_BYTES = 20 * 1024 * 1024  # budget for (double-buffered) tiles


def _round_up(x, m):
    return ((x + m - 1) // m) * m


# --------------------- basis construction (cached per (N, p, pad, dtype)) ----

@functools.lru_cache(maxsize=None)
def _get_basis(N, p, pad_to, dtype_name):
    """Cosine basis W[n, k] = cos(pi*n*(2k+1)/(2N)), optionally lane-packed.

    For N < 128 the basis is replicated p times along the diagonal of a
    (p*N, p*N) block-diagonal matrix so that p independent length-N rows can
    be packed into one lane-dense row (y_packed = x_packed @ Wb).  For large
    N the basis can be zero-padded to (pad_to, pad_to) so both the output and
    contraction dims are MXU/lane aligned.  Built once on the host (float64)
    and cached as a device array.
    """
    n = np.arange(N, dtype=np.float64)[:, None]
    k = np.arange(N, dtype=np.float64)[None, :]
    W = np.cos(np.pi * n * (2.0 * k + 1.0) / (2.0 * N))
    if p > 1:
        Wb = np.zeros((p * N, p * N), dtype=np.float64)
        for a in range(p):
            Wb[a * N:(a + 1) * N, a * N:(a + 1) * N] = W
        W = Wb
    K = W.shape[0]
    if pad_to > K:
        Wp = np.zeros((pad_to, pad_to), dtype=np.float64)
        Wp[:K, :K] = W
        W = Wp
    return jnp.asarray(W, dtype=np.dtype(dtype_name))


def get_expk(N, dtype=jnp.float32):
    # Mirrors dreamplace.discrete_spectral_transform.get_expk:
    # stack([2*cos(pi*k/(2N)), 2*sin(pi*k/(2N))], -1), shape (N, 2).
    # Kept for interface fidelity only; the direct matmul formulation does not
    # need the FFT twiddle table.
    u = jnp.arange(N, dtype=dtype) * (np.pi / (2.0 * N))
    return jnp.stack([2.0 * jnp.cos(u), 2.0 * jnp.sin(u)], axis=-1)


# --------------------- kernels ------------------------------------------------

def _idxct_kernel(x_ref, w_ref, o_ref):
    # Single-shot (tm, K) @ (K, K) matmul on the MXU, f32 accumulation.
    o_ref[...] = jnp.dot(
        x_ref[...], w_ref[...], preferred_element_type=jnp.float32
    ).astype(o_ref.dtype)


def _idxct_kernel_tiled(x_ref, w_ref, o_ref, acc_ref):
    # K-tiled matmul: accumulate into an f32 VMEM scratch across the k axis.
    @pl.when(pl.program_id(2) == 0)
    def _():
        acc_ref[...] = jnp.zeros_like(acc_ref)

    acc_ref[...] += jnp.dot(
        x_ref[...], w_ref[...], preferred_element_type=jnp.float32
    )

    @pl.when(pl.program_id(2) == pl.num_programs(2) - 1)
    def _():
        o_ref[...] = acc_ref[...].astype(o_ref.dtype)


# --------------------- wrapper ------------------------------------------------

def idxct(x, expk=None):
    """Pallas TPU implementation of dreamplace idxct along the last axis."""
    N = x.shape[-1]
    dtype = x.dtype
    itemsize = np.dtype(dtype).itemsize

    x2 = x.reshape(-1, N)
    M = x2.shape[0]

    # Lane-pack small transforms: p independent length-N rows share one
    # lane-dense 128-wide row via a block-diagonal basis.
    p = max(1, 128 // N) if N < 128 else 1
    if p > 1 and M % p != 0:
        # Pad only the handful of rows needed so M is divisible by p.
        x2 = jnp.pad(x2, ((0, p - M % p), (0, 0)))
    Mrows = x2.shape[0] // p
    K = p * N
    xp = x2.reshape(Mrows, K)  # contiguous row-major reshape, no data movement

    if K > 1024:
        # ---------------- large-N path: tiled output + contraction dims ------
        # 256-wide tiles match the v6e/v7x 256x256 MXU (and remain aligned for
        # v5e's 128x128 MXU); fall back to 128 only if it avoids padding.
        tkn = 128 if (K % 128 == 0 and K % 256 != 0) else 256
        Kp = _round_up(K, tkn)
        if Kp != K:
            # Zero-pad the contraction dim of x; padded basis rows/cols are 0,
            # so the result is unchanged and extra output columns are sliced.
            xp = jnp.pad(xp, ((0, 0), (0, Kp - K)))
        W = _get_basis(N, p, Kp, np.dtype(dtype).name)

        # Pick the row tile from a VMEM budget (x + out double-buffered, f32 acc).
        per_row = 4 * tkn * itemsize + 4 * tkn
        w_bytes = 2 * tkn * tkn * itemsize
        tm_cap = max(8, ((_TILE_BUDGET_BYTES - w_bytes) // per_row) // 8 * 8)
        tm = min(1024, tm_cap, _round_up(Mrows, 8))
        grid_m = pl.cdiv(Mrows, tm)

        out = pl.pallas_call(
            _idxct_kernel_tiled,
            out_shape=jax.ShapeDtypeStruct((Mrows, Kp), dtype),
            grid_spec=pltpu.PrefetchScalarGridSpec(
                num_scalar_prefetch=0,
                grid=(grid_m, Kp // tkn, Kp // tkn),
                in_specs=[
                    pl.BlockSpec((tm, tkn), lambda i, j, k: (i, k)),   # x tile
                    pl.BlockSpec((tkn, tkn), lambda i, j, k: (k, j)),  # W tile
                ],
                out_specs=pl.BlockSpec((tm, tkn), lambda i, j, k: (i, j)),
                scratch_shapes=[pltpu.VMEM((tm, tkn), jnp.float32)],
            ),
            compiler_params=pltpu.CompilerParams(
                dimension_semantics=("parallel", "parallel", "arbitrary"),
                vmem_limit_bytes=_VMEM_LIMIT_BYTES,
            ),
        )(xp, W)
        if Kp != K:
            out = out[:, :K]
        # TODO(synk): for very large N (>= ~4096) the O(N log N) FFT/irfft
        # 2N-padding formulation of the C++ backend would beat this dense
        # O(N^2) matmul; not implemented here.
    else:
        # ---------------- small/moderate-N path: full basis resident ---------
        # Whole (K, K) basis stays in VMEM (constant index_map -> no re-DMA);
        # one lane-dense (tm, K) x (K, K) MXU matmul per grid step.  Partial
        # final row block is handled by Pallas masking (no jnp.pad of x).
        W = _get_basis(N, p, 0, np.dtype(dtype).name)

        per_row = 4 * K * itemsize            # x dbuf + out dbuf per row
        w_bytes = 2 * K * K * itemsize
        tm_cap = max(8, ((_TILE_BUDGET_BYTES - w_bytes) // per_row) // 8 * 8)
        tm = min(2048, tm_cap, _round_up(Mrows, 8))
        grid_m = pl.cdiv(Mrows, tm)

        out = pl.pallas_call(
            _idxct_kernel,
            out_shape=jax.ShapeDtypeStruct((Mrows, K), dtype),
            grid_spec=pltpu.PrefetchScalarGridSpec(
                num_scalar_prefetch=0,
                grid=(grid_m,),
                in_specs=[
                    pl.BlockSpec((tm, K), lambda i: (i, 0)),   # x row tile
                    pl.BlockSpec((K, K), lambda i: (0, 0)),    # full basis
                ],
                out_specs=pl.BlockSpec((tm, K), lambda i: (i, 0)),
            ),
            compiler_params=pltpu.CompilerParams(
                dimension_semantics=("parallel",),
                vmem_limit_bytes=_VMEM_LIMIT_BYTES,
            ),
        )(xp, W)

    # Unpack lanes back to rows and drop any row padding added for packing.
    y2 = out.reshape(-1, N)
    if y2.shape[0] != M:
        y2 = y2[:M]
    return y2.reshape(x.shape)


class IDXCT:
    """JAX analogue of the PyTorch IDXCT nn.Module."""

    def __init__(self, expk=None):
        self.expk = expk

    def __call__(self, x):
        if self.expk is None or self.expk.shape[-2] != x.shape[-1]:
            self.expk = get_expk(x.shape[-1], dtype=x.dtype)
        return idxct(x, self.expk)


if __name__ == "__main__":
    key = jax.random.PRNGKey(0)
    # Small shape consistent with the module: transform acts on the last dim (N=16).
    x = jax.random.normal(key, (2, 4, 16, 16), dtype=jnp.float32)

    mod = IDXCT()
    y = mod(x)
    y = jax.block_until_ready(y)

    # Pure-JAX reference: y_k = sum_n x_n cos(pi*n*(2k+1)/(2N))
    N = x.shape[-1]
    n = np.arange(N)[:, None].astype(np.float64)
    k = np.arange(N)[None, :].astype(np.float64)
    W_ref = jnp.asarray(np.cos(np.pi * n * (2.0 * k + 1.0) / (2.0 * N)), jnp.float32)
    y_ref = jnp.einsum("...n,nk->...k", x, W_ref)

    assert y.shape == x.shape and y.dtype == x.dtype
    np.testing.assert_allclose(np.asarray(y), np.asarray(y_ref), rtol=1e-4, atol=1e-4)
    print("KERNEL_OK")
</pallas_src>

<mosaic_0001>
module attributes {stable_mosaic.version = 11 : i64} {
  func.func @_idxct_kernel(%arg0: i32, %arg1: memref<16x128xf32, #tpu.memory_space<vmem>>, %arg2: memref<128x128xf32, #tpu.memory_space<vmem>>, %arg3: memref<16x128xf32, #tpu.memory_space<vmem>>) attributes {dimension_semantics = [#tpu.dimension_semantics<parallel>], iteration_bounds = array<i64: 1>, scalar_prefetch = 0 : i64, scratch_operands = 0 : i64, tpu.core_type = #tpu.core_type<tc>, window_params = [{transform_indices = @transform_0, window_bounds = array<i64: 16, 128>}, {pipeline_mode = #tpu.pipeline_mode<synchronous>, transform_indices = @transform_1, window_bounds = array<i64: 128, 128>}, {transform_indices = @transform_2, window_bounds = array<i64: 16, 128>}]} {
    %c0 = arith.constant 0 : index
    %c0_0 = arith.constant 0 : index
    %0 = vector.load %arg1[%c0, %c0_0] : memref<16x128xf32, #tpu.memory_space<vmem>>, vector<16x128xf32>
    %c0_1 = arith.constant 0 : index
    %c0_2 = arith.constant 0 : index
    %1 = vector.load %arg2[%c0_1, %c0_2] : memref<128x128xf32, #tpu.memory_space<vmem>>, vector<128x128xf32>
    %cst = arith.constant dense<0.000000e+00> : vector<16x128xf32>
    %2 = tpu.matmul %0, %1, %cst {dimension_numbers = #tpu.dot_dimension_numbers<[1], [0], [0], [1], [0, 0, 1, 1], [], []>} : vector<16x128xf32>, vector<128x128xf32>, vector<16x128xf32> -> vector<16x128xf32>
    %c0_3 = arith.constant 0 : index
    %c0_4 = arith.constant 0 : index
    %3 = vector.load %arg3[%c0_3, %c0_4] : memref<16x128xf32, #tpu.memory_space<vmem>>, vector<16x128xf32>
    tpu.vector_store %arg3[%c0_3, %c0_4], %2 {strides = array<i32>} : memref<16x128xf32, #tpu.memory_space<vmem>>, vector<16x128xf32>,
    return
  }
  func.func @transform_0(%arg0: i32) -> (i32, i32) {
    %c0_i32 = arith.constant 0 : i32
    %c0_i32_0 = arith.constant 0 : i32
    return %arg0, %c0_i32 : i32, i32
  }
  func.func @transform_1(%arg0: i32) -> (i32, i32) {
    %c0_i32 = arith.constant 0 : i32
    %c0_i32_0 = arith.constant 0 : i32
    %c0_i32_1 = arith.constant 0 : i32
    return %c0_i32, %c0_i32_0 : i32, i32
  }
  func.func @transform_2(%arg0: i32) -> (i32, i32) {
    %c0_i32 = arith.constant 0 : i32
    %c0_i32_0 = arith.constant 0 : i32
    return %arg0, %c0_i32 : i32, i32
  }
}

</mosaic_0001>

<llo_original>
// kernel: tpu_custom_call.1
$region0: #{tpu_custom_call.1}
  #allocation0 [shape = 'u32[]', space=smem, size = 0x4, offset = 0x4, fixed_abs, tag = 'smem constant byte address 0x4 - core index']
  #allocation1 [shape = 'u32[144,128]{1,0:T(1,128)}', space=vmem, size = 0x12000, scoped, tag = 'internal scratch']
  %s0 = inlined_call_operand.hbm [shape: f32[16,128], index: 0, kind: input, shape index: {}]
  %s1 = inlined_call_operand.hbm [shape: f32[128,128], index: 1, kind: input, shape index: {}]
  %s2 = inlined_call_operand.hbm [shape: f32[16,128], index: 2, kind: output, shape index: {}]
  %s3 = sld [smem:[#allocation0]]
  $region26: #{tpu_custom_call.1} parent=0
    _
  %s5 = ssub.s32 1, %s3
  %s6 = scalar_select 0, %s5, %s3
  $region1: #{tpu_custom_call.1} parent=0
    #allocation2 [shape = 'u8[8192]{0}', space=vmem, size = 0x2000, scoped, tag = 'input window, operand 0, single buffered']
    #allocation3 [shape = 's32[1]{0}', space=sflag, size = 0x4, scoped, tag = 'scoped memory for tpu_custom_call.1']
    #allocation4 [shape = 's32[1]{0}', space=sflag, size = 0x4, scoped, tag = 'scoped memory for tpu_custom_call.1']
    #allocation5 [shape = 'u8[65536]{0}', space=vmem, size = 0x10000, scoped, tag = 'input window, operand 1, single buffered']
    #allocation6 [shape = 's32[1]{0}', space=sflag, size = 0x4, scoped, tag = 'scoped memory for tpu_custom_call.1']
    #allocation7 [shape = 'u8[8192]{0}', space=vmem, size = 0x2000, scoped, tag = 'output window, operand 0, single buffered']
    %7 = vsyncpa [#allocation3], 0
    %8 = vsyncpa [#allocation6], 0
    %9 = vsyncpa [#allocation4], 0
    // Predicated region
    $region2: #{tpu_custom_call.1} parent=1 // pred_check
      _
    $region3: #{tpu_custom_call.1} parent=1 // pred_check_branch
      %11 = sbr.rel (0) target = $region5
    $region4: #{tpu_custom_call.1} parent=1 // pred_region
      %s13 = ssub.s32 256, 256
      %14 = vsyncadd [#allocation3], %s13
      %s15 = sshll.u32 [#allocation2], 4
      %s16 = int_to_ptr.vmem [resolvable:$true] %s15
      %21 = dma.hbm_to_vmem [thread:$0]  %s0, 256, %s16, [#allocation3], 128, 128, 8
    $region5: #{tpu_custom_call.1} parent=1 // pred_fallthru
      _
    // Predicated region
    $region6: #{tpu_custom_call.1} parent=1 // pred_check
      _
    $region7: #{tpu_custom_call.1} parent=1 // pred_check_branch
      %23 = sbr.rel (0) target = $region9
    $region8: #{tpu_custom_call.1} parent=1 // pred_region
      %s25 = ssub.s32 2048, 2048
      %26 = vsyncadd [#allocation6], %s25
      %s27 = sshll.u32 [#allocation5], 4
      %s28 = int_to_ptr.vmem [resolvable:$true] %s27
      %33 = dma.hbm_to_vmem [thread:$0]  %s1, 2048, %s28, [#allocation6], 128, 128, 8
    $region9: #{tpu_custom_call.1} parent=1 // pred_fallthru
      _
    // Predicated region
    $region10: #{tpu_custom_call.1} parent=1 // pred_check
      _
    $region11: #{tpu_custom_call.1} parent=1 // pred_check_branch
      %35 = sbr.rel (0) target = $region13
    $region12: #{tpu_custom_call.1} parent=1 // pred_region
      %36 = dma.done [#allocation3], 256
    $region13: #{tpu_custom_call.1} parent=1 // pred_fallthru
      _
    // Predicated region
    $region14: #{tpu_custom_call.1} parent=1 // pred_check
      _
    $region15: #{tpu_custom_call.1} parent=1 // pred_check_branch
      %38 = sbr.rel (0) target = $region17
    $region16: #{tpu_custom_call.1} parent=1 // pred_region
      %39 = dma.done [#allocation6], 2048
    $region17: #{tpu_custom_call.1} parent=1 // pred_fallthru
      _
    %v40 = vld [vmem:[#allocation2] sm:$0xff]
    %v41 = vld [vmem:[#allocation2 + $0x8] sm:$0xff]
    %v42 = vld [vmem:[#allocation5] sm:$0xff]
    %v43 = vld [vmem:[#allocation5 + $0x8] sm:$0xff]
    %v44 = vld [vmem:[#allocation5 + $0x10] sm:$0xff]
    %v45 = vld [vmem:[#allocation5 + $0x18] sm:$0xff]
    %v46 = vld [vmem:[#allocation5 + $0x20] sm:$0xff]
    %v47 = vld [vmem:[#allocation5 + $0x28] sm:$0xff]
    %v48 = vld [vmem:[#allocation5 + $0x30] sm:$0xff]
    %v49 = vld [vmem:[#allocation5 + $0x38] sm:$0xff]
    %v50 = vld [vmem:[#allocation5 + $0x40] sm:$0xff]
    %v51 = vld [vmem:[#allocation5 + $0x48] sm:$0xff]
    %v52 = vld [vmem:[#allocation5 + $0x50] sm:$0xff]
    %v53 = vld [vmem:[#allocation5 + $0x58] sm:$0xff]
    %v54 = vld [vmem:[#allocation5 + $0x60] sm:$0xff]
    %v55 = vld [vmem:[#allocation5 + $0x68] sm:$0xff]
    %v56 = vld [vmem:[#allocation5 + $0x70] sm:$0xff]
    %v57 = vld [vmem:[#allocation5 + $0x78] sm:$0xff]
    %58 = vmatprep.subr.mxu0 0.0
    %59 = vmatpush1.msra.mxu0 %v42
    %60 = vmatprep.subr.mxu0 0.0
    %61 = vmatpush1.msra.mxu0 %v43
    %62 = vmatprep.subr.mxu0 0.0
    %63 = vmatpush1.msra.mxu0 %v44
    %64 = vmatprep.subr.mxu0 0.0
    %65 = vmatpush1.msra.mxu0 %v45
    %66 = vmatprep.subr.mxu0 0.0
    %67 = vmatpush1.msra.mxu0 %v46
    %68 = vmatprep.subr.mxu0 0.0
    %69 = vmatpush1.msra.mxu0 %v47
    %70 = vmatprep.subr.mxu0 0.0
    %71 = vmatpush1.msra.mxu0 %v48
    %72 = vmatprep.subr.mxu0 0.0
    %73 = vmatpush1.msra.mxu0 %v49
    %74 = vmatprep.subr.mxu0 0.0
    %75 = vmatpush1.msra.mxu0 %v50
    %76 = vmatprep.subr.mxu0 0.0
    %77 = vmatpush1.msra.mxu0 %v51
    %78 = vmatprep.subr.mxu0 0.0
    %79 = vmatpush1.msra.mxu0 %v52
    %80 = vmatprep.subr.mxu0 0.0
    %81 = vmatpush1.msra.mxu0 %v53
    %82 = vmatprep.subr.mxu0 0.0
    %83 = vmatpush1.msra.mxu0 %v54
    %84 = vmatprep.subr.mxu0 0.0
    %85 = vmatpush1.msra.mxu0 %v55
    %86 = vmatprep.subr.mxu0 0.0
    %87 = vmatpush1.msra.mxu0 %v56
    %88 = vmatprep.subr.mxu0 0.0
    %89 = vmatpush1.msra.mxu0 %v57
    %90 = vmatprep.subr.mxu0 0.0
    %91 = vmatpush1.msra.mxu0 0.0
    %92 = vmatprep.subr.mxu0 0.0
    %93 = vmatpush1.msra.mxu0 0.0
    %94 = vmatprep.subr.mxu0 0.0
    %95 = vmatpush1.msra.mxu0 0.0
    %96 = vmatprep.subr.mxu0 0.0
    %97 = vmatpush1.msra.mxu0 0.0
    %98 = vmatprep.subr.mxu0 0.0
    %99 = vmatpush1.msra.mxu0 0.0
    %100 = vmatprep.subr.mxu0 0.0
    %101 = vmatpush1.msra.mxu0 0.0
    %102 = vmatprep.subr.mxu0 0.0
    %103 = vmatpush1.msra.mxu0 0.0
    %104 = vmatprep.subr.mxu0 0.0
    %105 = vmatpush1.msra.mxu0 0.0
    %106 = vmatprep.subr.mxu0 0.0
    %107 = vmatpush1.msra.mxu0 0.0
    %108 = vmatprep.subr.mxu0 0.0
    %109 = vmatpush1.msra.mxu0 0.0
    %110 = vmatprep.subr.mxu0 0.0
    %111 = vmatpush1.msra.mxu0 0.0
    %112 = vmatprep.subr.mxu0 0.0
    %113 = vmatpush1.msra.mxu0 0.0
    %114 = vmatprep.subr.mxu0 0.0
    %115 = vmatpush1.msra.mxu0 0.0
    %116 = vmatprep.subr.mxu0 0.0
    %117 = vmatpush1.msra.mxu0 0.0
    %118 = vmatprep.subr.mxu0 0.0
    %119 = vmatpush1.msra.mxu0 0.0
    %120 = vmatprep.subr.mxu0 0.0
    %121 = vmatpush1.msra.mxu0 0.0
    %122 = vmatprep.mubr.f32.mxu0 0.0
    %123 = vmatmul.mubr.f32.gmra.mrb[0].mxu0 %v40
    %v124 = vpop.f32.mrb[0].mxu0
    %v125 = vadd.f32 0.0, %v124
    %v126 = vpop.f32.mrb[0].mxu0
    %127 = vmatprep.mubr.f32.mxu0 0.0
    %128 = vmatmul.mubr.f32.gmra.mrb[0].mxu0 %v41
    %v129 = vpop.f32.mrb[0].mxu0
    %v130 = vadd.f32 0.0, %v129
    %v131 = vpop.f32.mrb[0].mxu0
    %132 = vdwg.mxu0
    %133 = vst [vmem:[#allocation7] sm:$0xff] %v125
    %134 = vst [vmem:[#allocation7 + $0x8] sm:$0xff] %v130
    // Predicated region
    $region18: #{tpu_custom_call.1} parent=1 // pred_check
      _
    $region19: #{tpu_custom_call.1} parent=1 // pred_check_branch
      %136 = sbr.rel (0) target = $region21
    $region20: #{tpu_custom_call.1} parent=1 // pred_region
      %s138 = ssub.s32 256, 256
      %139 = vsyncadd [#allocation4], %s138
      %s140 = sshll.u32 [#allocation7], 4
      %s141 = int_to_ptr.vmem [resolvable:$true] %s140
      %146 = dma.vmem_to_hbm [thread:$0]  %s141, 256, %s2, [#allocation4], 128, 128, 8
    $region21: #{tpu_custom_call.1} parent=1 // pred_fallthru
      _
    // Predicated region
    $region22: #{tpu_custom_call.1} parent=1 // pred_check
      _
    $region23: #{tpu_custom_call.1} parent=1 // pred_check_branch
      %148 = sbr.rel (0) target = $region25
    $region24: #{tpu_custom_call.1} parent=1 // pred_region
      %149 = dma.done [#allocation4], 256
    $region25: #{tpu_custom_call.1} parent=1 // pred_fallthru
      _
    %150 = vsyncpa [#allocation3], 1
    %151 = vsyncpa [#allocation6], 1
    %152 = vsyncpa [#allocation4], 1

</llo_original>
